<compile_context>
chip_gen: v7x
topology: tpu7x:2x2x1
jax: 0.10.0
libtpu: 0.0.40
codegen_flags: <defaults>
</compile_context>

<pallas_src>
import numpy as np
import jax
import jax.numpy as jnp
from jax.experimental import pallas as pl
from jax.experimental.pallas import tpu as pltpu

MIN_DEPTH = 0.1
MAX_DEPTH = 100.0


# ---------------------------------------------------------------------------
# math helpers (usable both inside kernels and in the pure-JAX reference)
# ---------------------------------------------------------------------------
def _erf(x):
    # Abramowitz & Stegun 7.1.26 (|err| <= 1.5e-7); exp/mul/add/where only.
    a1, a2, a3, a4, a5 = 0.254829592, -0.284496736, 1.421413741, -1.453152027, 1.061405429
    p = 0.3275911
    ax = jnp.abs(x)
    t = 1.0 / (1.0 + p * ax)
    poly = ((((a5 * t + a4) * t + a3) * t + a2) * t + a1) * t
    y = 1.0 - poly * jnp.exp(-ax * ax)
    return jnp.where(x >= 0, y, -y)


def _gelu_exact(x):
    return 0.5 * x * (1.0 + _erf(x * (1.0 / np.sqrt(2.0))))


def _interp_matrix(in_size, out_size):
    """Row weights of F.interpolate(mode='bilinear', align_corners=False)."""
    i = jnp.arange(out_size)
    src = (i.astype(jnp.float32) + 0.5) * (in_size / out_size) - 0.5
    src = jnp.maximum(src, 0.0)
    i0 = jnp.minimum(jnp.floor(src).astype(jnp.int32), in_size - 1)
    i1 = jnp.minimum(i0 + 1, in_size - 1)
    lam = src - i0.astype(jnp.float32)
    m = jnp.zeros((out_size, in_size), jnp.float32)
    m = m.at[i, i0].add(1.0 - lam)
    m = m.at[i, i1].add(lam)
    return m


def _pick_tile_h(H, max_tile=32):
    """Largest even divisor of H <= max_tile, preferring >= 2 row tiles."""
    best = H
    for t in range(min(H, max_tile), 0, -1):
        if H % t == 0 and t % 2 == 0:
            if H // t >= 2:
                return t
            best = t
    return best


# ---------------------------------------------------------------------------
# Pallas kernel 1: DispHead (3x3 conv -> sigmoid) + bilinear x4 + *max_depth
# ---------------------------------------------------------------------------
def disp_head_kernel(x_ref, w9_ref, bconv_ref, lh_ref, lwt_ref, out_ref, d_ref):
    # x_ref:   (1, 1, C, Mw_pad) bf16  channel-first padded row-window, rows
    #          flattened on the lane axis (flat index = row*Wp + col, Wp=W+2)
    # w9_ref:  (9, C) bf16             conv taps, row t = ky*3+kx
    # bconv_ref: (1,) f32 in SMEM      conv bias (scalar)
    # lh_ref:  (1, 4*TH, THc) f32      per-tile row interpolation block
    # lwt_ref: (W, 4W) f32             column interp^T * MAX_DEPTH
    # out_ref: (1, 4*TH, 4W) f32
    # d_ref:   (THc, W) f32 VMEM       sigmoid(conv) rows for this tile
    THc, W = d_ref.shape
    Wp = W + 2
    Mc = THc * Wp

    # 1) channel-contract all 9 taps with ONE bf16 MXU matmul (f32 accumulate):
    #    z[t, r*Wp + j] = sum_c w[t, c] * x_pad[c, r, j]
    z = jnp.dot(w9_ref[...], x_ref[0, 0], preferred_element_type=jnp.float32)

    # 2) 3x3 shift-add in the flattened row-major domain: tap (ky, kx) of the
    #    conv output at flat position p is z[t, p + ky*Wp + kx], so each tap is
    #    one contiguous lane-slice -> 9 slices + 8 adds total (no lane-padded
    #    scratch, no one-hot masks, no cross-lane reduce).
    acc = z[0:1, 0:Mc]
    for t in range(1, 9):
        ky, kx = divmod(t, 3)
        s = ky * Wp + kx
        acc = acc + z[t:t + 1, s:s + Mc]

    dflat = jax.nn.sigmoid(acc + bconv_ref[0])            # (1, THc*Wp)

    # 3) un-flatten the conv rows into the small (THc, W) scratch
    for hl in range(THc):
        d_ref[pl.ds(hl, 1), :] = dflat[:, hl * Wp: hl * Wp + W]

    # 4) x4 bilinear upsample as two f32 MXU matmuls (max_depth folded in lwt)
    up = jnp.dot(lh_ref[0], d_ref[...], preferred_element_type=jnp.float32)   # (4TH, W)
    out_ref[0] = jnp.dot(up, lwt_ref[...], preferred_element_type=jnp.float32)


def disp_head_forward(q0_nchw, w_conv, b_conv, scale=4, tile_h=None):
    """q0_nchw: (N, C, H, W) -> (N, 1, scale*H, scale*W) (already * max_depth)."""
    assert scale == 4
    N, C, H, W = q0_nchw.shape
    if tile_h is None:
        tile_h = _pick_tile_h(H)
    assert H % tile_h == 0
    n_t = H // tile_h
    THw, THc, Wp = tile_h + 4, tile_h + 2, W + 2
    Mw = THw * Wp
    Mw_pad = -(-(Mw + 2) // 128) * 128          # slice margin + lane-dense x blocks

    # single fused pad+cast pass, NCHW kept (no transpose copy).
    # TODO(synk): remove this remaining wrapper copy by having upstream SAM emit
    # the padded channel-first bf16 layout (or via an in-kernel halo DMA).
    xp = jnp.pad(q0_nchw, ((0, 0), (0, 0), (2, 2), (1, 1))).astype(jnp.bfloat16)
    # overlapping row windows (+-2 halo rows: conv pad + bilinear row reach),
    # rows*cols flattened onto the lane axis.
    xw = jnp.stack([xp[:, :, t * tile_h: t * tile_h + THw, :] for t in range(n_t)],
                   axis=1)                                   # (N, n_t, C, THw, Wp)
    xw = xw.reshape(N, n_t, C, Mw)
    xw = jnp.pad(xw, ((0, 0), (0, 0), (0, 0), (0, Mw_pad - Mw)))

    w9 = w_conv.astype(jnp.bfloat16)                         # (9, C), row = ky*3+kx
    bconv = jnp.reshape(b_conv, (1,)).astype(jnp.float32)

    lh = _interp_matrix(H, scale * H)                        # (4H, H)
    lh_ext = jnp.pad(lh, ((0, 0), (1, 1)))                   # col j <-> conv row j-1
    lh_tiles = jnp.stack(
        [lh_ext[scale * t * tile_h: scale * (t + 1) * tile_h,
                t * tile_h: t * tile_h + THc] for t in range(n_t)], axis=0)
    lwt = _interp_matrix(W, scale * W).T * MAX_DEPTH         # (W, 4W), max_depth folded

    out = pl.pallas_call(
        disp_head_kernel,
        out_shape=jax.ShapeDtypeStruct((N, scale * H, scale * W), jnp.float32),
        grid=(N, n_t),
        in_specs=[
            pl.BlockSpec((1, 1, C, Mw_pad), lambda n, t: (n, t, 0, 0)),
            pl.BlockSpec((9, C), lambda n, t: (0, 0)),
            pl.BlockSpec(memory_space=pltpu.MemorySpace.SMEM),       # scalar bias
            pl.BlockSpec((1, scale * tile_h, THc), lambda n, t: (t, 0, 0)),
            pl.BlockSpec((W, scale * W), lambda n, t: (0, 0)),
        ],
        out_specs=pl.BlockSpec((1, scale * tile_h, scale * W), lambda n, t: (n, t, 0)),
        scratch_shapes=[pltpu.VMEM((THc, W), jnp.float32)],
        compiler_params=pltpu.CompilerParams(
            dimension_semantics=("parallel", "parallel")),
    )(xw, w9, bconv, lh_tiles, lwt)
    return out[:, None, :, :]


# ---------------------------------------------------------------------------
# Pallas kernel 2: BCP MLP (512 -> 2048 -> 128) -> softmax -> bin centers.
# Weights streamed as bf16 (halved HBM bytes), single grid step.
# ---------------------------------------------------------------------------
def bcp_kernel(xm_ref, w1_ref, b1_ref, w2_ref, b2_ref, tri_ref, out_ref):
    h = jnp.dot(xm_ref[...], w1_ref[...],
                preferred_element_type=jnp.float32) + b1_ref[...]
    h = _gelu_exact(h).astype(jnp.bfloat16)
    y = jnp.dot(h, w2_ref[...],
                preferred_element_type=jnp.float32) + b2_ref[...]
    y = y - jnp.max(y, axis=1, keepdims=True)
    e = jnp.exp(y)
    bins = e / jnp.sum(e, axis=1, keepdims=True)             # softmax (sums to 1)
    widths = (MAX_DEPTH - MIN_DEPTH) * bins
    csum = jnp.dot(widths, tri_ref[...], preferred_element_type=jnp.float32)
    # centers[k] = 0.5*(edge[k] + edge[k+1]) with edge[0] = min_depth
    out_ref[...] = MIN_DEPTH + csum - 0.5 * widths


def bcp_forward(q4_nchw, w1, b1, w2, b2):
    """q4_nchw: (N, 512, h, w) -> bin centers (N, 128, 1, 1)."""
    N, C, h, w = q4_nchw.shape
    hidden = w1.shape[1]
    nbins = w2.shape[1]

    # spatial mean: tiny, plain XLA (layout plumbing, not kernel work)
    xm = jnp.mean(q4_nchw.reshape(N, C, h * w), axis=2).astype(jnp.bfloat16)
    w1b = w1.astype(jnp.bfloat16)
    w2b = w2.astype(jnp.bfloat16)
    b1f = jnp.reshape(b1, (1, hidden)).astype(jnp.float32)
    b2f = jnp.reshape(b2, (1, nbins)).astype(jnp.float32)
    tri = jnp.triu(jnp.ones((nbins, nbins), jnp.float32))    # tri[k,j]=1 iff k<=j

    centers = pl.pallas_call(
        bcp_kernel,
        out_shape=jax.ShapeDtypeStruct((N, nbins), jnp.float32),
        grid=(1,),
        in_specs=[
            pl.BlockSpec((N, C), lambda k: (0, 0)),
            pl.BlockSpec((C, hidden), lambda k: (0, 0)),
            pl.BlockSpec((1, hidden), lambda k: (0, 0)),
            pl.BlockSpec((hidden, nbins), lambda k: (0, 0)),
            pl.BlockSpec((1, nbins), lambda k: (0, 0)),
            pl.BlockSpec((nbins, nbins), lambda k: (0, 0)),
        ],
        out_specs=pl.BlockSpec((N, nbins), lambda k: (0, 0)),
        compiler_params=pltpu.CompilerParams(
            dimension_semantics=("arbitrary",)),
    )(xm, w1b, b1f, w2b, b2f, tri)
    return centers.reshape(N, nbins, 1, 1)


# ---------------------------------------------------------------------------
# PixelFormer head forward (training-mode outputs)
# ---------------------------------------------------------------------------
def pixelformer_head_forward(q0, q4, params, training=True):
    # f = DispHead(q0, scale=4) * max_depth   (max_depth folded into the kernel)
    f = disp_head_forward(q0, params["w_conv"], params["b_conv"], scale=4)
    if training:
        bin_centers = bcp_forward(q4, params["w1"], params["b1"],
                                  params["w2"], params["b2"])
        return f, q4, bin_centers
    return f


# ---------------------------------------------------------------------------
# pure-JAX f32 reference (for a sanity check)
# ---------------------------------------------------------------------------
def _reference(q0, q4, params):
    N, C, H, W = q0.shape
    x = jnp.transpose(q0, (0, 2, 3, 1))
    xpad = jnp.pad(x, ((0, 0), (1, 1), (1, 1), (0, 0)))
    wr = params["w_conv"].reshape(3, 3, C)
    d = jnp.zeros((N, H, W), jnp.float32)
    for ky in range(3):
        for kx in range(3):
            d = d + jnp.einsum("nhwc,c->nhw",
                               xpad[:, ky:ky + H, kx:kx + W, :], wr[ky, kx])
    d = jax.nn.sigmoid(d + params["b_conv"][0])
    lh = _interp_matrix(H, 4 * H)
    lw = _interp_matrix(W, 4 * W)
    f = jnp.einsum("ab,nbc,dc->nad", lh, d, lw)[:, None] * MAX_DEPTH

    xm = jnp.mean(q4.reshape(q4.shape[0], q4.shape[1], -1), axis=2)
    hdd = _gelu_exact(xm @ params["w1"] + params["b1"])
    y = hdd @ params["w2"] + params["b2"]
    bins = jax.nn.softmax(y, axis=1)
    bins = bins / bins.sum(axis=1, keepdims=True)
    widths = (MAX_DEPTH - MIN_DEPTH) * bins
    widths = jnp.pad(widths, ((0, 0), (1, 0)), constant_values=MIN_DEPTH)
    edges = jnp.cumsum(widths, axis=1)
    centers = 0.5 * (edges[:, :-1] + edges[:, 1:])
    return f, centers.reshape(centers.shape[0], -1, 1, 1)


# ---------------------------------------------------------------------------
if __name__ == "__main__":
    key = jax.random.PRNGKey(0)
    ks = jax.random.split(key, 8)

    C0 = 128          # sam_dims[0] -> DispHead input_dim
    N, H, W = 2, 16, 16
    h4, w4 = 2, 2     # q4 is at 1/8 of q0's resolution

    params = {
        "w_conv": jax.random.normal(ks[0], (9, C0), jnp.float32) * 0.05,
        "b_conv": jnp.full((1,), 0.01, jnp.float32),
        "w1": jax.random.normal(ks[1], (512, 2048), jnp.float32) * 0.02,
        "b1": jax.random.normal(ks[2], (1, 2048), jnp.float32) * 0.02,
        "w2": jax.random.normal(ks[3], (2048, 128), jnp.float32) * 0.02,
        "b2": jax.random.normal(ks[4], (1, 128), jnp.float32) * 0.02,
    }

    q0 = jax.random.normal(ks[5], (N, C0, H, W), jnp.float32)      # SAM1 output
    q4 = jax.random.normal(ks[6], (N, 512, h4, w4), jnp.float32)   # decoder out

    f, q4_out, bin_centers = pixelformer_head_forward(q0, q4, params,
                                                      training=True)
    jax.block_until_ready((f, q4_out, bin_centers))

    f_ref, centers_ref = _reference(q0, q4, params)
    # f: conv runs in bf16 with f32 accumulation (upsample stays f32)
    np.testing.assert_allclose(np.asarray(f), np.asarray(f_ref),
                               rtol=2e-2, atol=2e-2)
    # bin centers: bf16 MLP weights with f32 accumulation / f32 epilogue
    np.testing.assert_allclose(np.asarray(bin_centers), np.asarray(centers_ref),
                               rtol=1e-2, atol=5e-2)
    np.testing.assert_allclose(np.asarray(q4_out), np.asarray(q4),
                               rtol=0, atol=0)

    print("KERNEL_OK")
</pallas_src>

<mosaic_0001>
module attributes {stable_mosaic.version = 11 : i64} {
  func.func @disp_head_kernel(%arg0: i32, %arg1: i32, %arg2: memref<1x1x128x256xbf16, #tpu.memory_space<vmem>>, %arg3: memref<9x128xbf16, #tpu.memory_space<vmem>>, %arg4: memref<1xf32, #tpu.memory_space<smem>>, %arg5: memref<1x32x10xf32, #tpu.memory_space<vmem>>, %arg6: memref<16x64xf32, #tpu.memory_space<vmem>>, %arg7: memref<1x32x64xf32, #tpu.memory_space<vmem>>, %arg8: memref<10x16xf32, #tpu.memory_space<vmem>>) attributes {dimension_semantics = [#tpu.dimension_semantics<parallel>, #tpu.dimension_semantics<parallel>], iteration_bounds = array<i64: 2, 2>, scalar_prefetch = 0 : i64, scratch_operands = 1 : i64, tpu.core_type = #tpu.core_type<tc>, window_params = [{transform_indices = @transform_0, window_bounds = array<i64: 1, 1, 128, 256>}, {pipeline_mode = #tpu.pipeline_mode<synchronous>, transform_indices = @transform_1, window_bounds = array<i64: 9, 128>}, {transform_indices = @transform_2, window_bounds = array<i64: 1>}, {transform_indices = @transform_3, window_bounds = array<i64: 1, 32, 10>}, {pipeline_mode = #tpu.pipeline_mode<synchronous>, transform_indices = @transform_4, window_bounds = array<i64: 16, 64>}, {transform_indices = @transform_5, window_bounds = array<i64: 1, 32, 64>}]} {
    %c0 = arith.constant 0 : index
    %c0_0 = arith.constant 0 : index
    %0 = vector.load %arg3[%c0, %c0_0] : memref<9x128xbf16, #tpu.memory_space<vmem>>, vector<9x128xbf16>
    %c0_1 = arith.constant 0 : index
    %c0_2 = arith.constant 0 : index
    %c0_3 = arith.constant 0 : index
    %c0_4 = arith.constant 0 : index
    %1 = vector.load %arg2[%c0_1, %c0_2, %c0_3, %c0_4] : memref<1x1x128x256xbf16, #tpu.memory_space<vmem>>, vector<1x1x128x256xbf16>
    %2 = vector.shape_cast %1 : vector<1x1x128x256xbf16> to vector<128x256xbf16>
    %cst = arith.constant dense<0.000000e+00> : vector<9x256xf32>
    %3 = tpu.matmul %0, %2, %cst {dimension_numbers = #tpu.dot_dimension_numbers<[1], [0], [0], [1], [0, 0, 1, 1], [], []>} : vector<9x128xbf16>, vector<128x256xbf16>, vector<9x256xf32> -> vector<9x256xf32>
    %4 = vector.extract_strided_slice %3 {offsets = [0, 0], sizes = [1, 180], strides = [1, 1]} : vector<9x256xf32> to vector<1x180xf32>
    %5 = vector.extract_strided_slice %3 {offsets = [1, 1], sizes = [1, 180], strides = [1, 1]} : vector<9x256xf32> to vector<1x180xf32>
    %6 = arith.addf %4, %5 : vector<1x180xf32>
    %7 = vector.extract_strided_slice %3 {offsets = [2, 2], sizes = [1, 180], strides = [1, 1]} : vector<9x256xf32> to vector<1x180xf32>
    %8 = arith.addf %6, %7 : vector<1x180xf32>
    %9 = vector.extract_strided_slice %3 {offsets = [3, 18], sizes = [1, 180], strides = [1, 1]} : vector<9x256xf32> to vector<1x180xf32>
    %10 = arith.addf %8, %9 : vector<1x180xf32>
    %11 = vector.extract_strided_slice %3 {offsets = [4, 19], sizes = [1, 180], strides = [1, 1]} : vector<9x256xf32> to vector<1x180xf32>
    %12 = arith.addf %10, %11 : vector<1x180xf32>
    %13 = vector.extract_strided_slice %3 {offsets = [5, 20], sizes = [1, 180], strides = [1, 1]} : vector<9x256xf32> to vector<1x180xf32>
    %14 = arith.addf %12, %13 : vector<1x180xf32>
    %15 = vector.extract_strided_slice %3 {offsets = [6, 36], sizes = [1, 180], strides = [1, 1]} : vector<9x256xf32> to vector<1x180xf32>
    %16 = arith.addf %14, %15 : vector<1x180xf32>
    %17 = vector.extract_strided_slice %3 {offsets = [7, 37], sizes = [1, 180], strides = [1, 1]} : vector<9x256xf32> to vector<1x180xf32>
    %18 = arith.addf %16, %17 : vector<1x180xf32>
    %19 = vector.extract_strided_slice %3 {offsets = [8, 38], sizes = [1, 180], strides = [1, 1]} : vector<9x256xf32> to vector<1x180xf32>
    %20 = arith.addf %18, %19 : vector<1x180xf32>
    %c0_5 = arith.constant 0 : index
    %21 = memref.load %arg4[%c0_5] : memref<1xf32, #tpu.memory_space<smem>>
    %22 = vector.broadcast %21 : f32 to vector<1x180xf32>
    %23 = arith.addf %20, %22 : vector<1x180xf32>
    %24 = arith.negf %23 : vector<1x180xf32>
    %25 = math.exp %24 : vector<1x180xf32>
    %cst_6 = arith.constant 1.000000e+00 : f32
    %26 = vector.broadcast %cst_6 : f32 to vector<1x180xf32>
    %27 = arith.addf %26, %25 : vector<1x180xf32>
    %28 = arith.divf %26, %27 : vector<1x180xf32>
    %29 = vector.extract_strided_slice %28 {offsets = [0, 0], sizes = [1, 16], strides = [1, 1]} : vector<1x180xf32> to vector<1x16xf32>
    %c0_7 = arith.constant 0 : index
    %c0_8 = arith.constant 0 : index
    %30 = vector.load %arg8[%c0_7, %c0_8] : memref<10x16xf32, #tpu.memory_space<vmem>>, vector<1x16xf32>
    tpu.vector_store %arg8[%c0_7, %c0_8], %29 {strides = array<i32>} : memref<10x16xf32, #tpu.memory_space<vmem>>, vector<1x16xf32>,
    %31 = vector.extract_strided_slice %28 {offsets = [0, 18], sizes = [1, 16], strides = [1, 1]} : vector<1x180xf32> to vector<1x16xf32>
    %c1 = arith.constant 1 : index
    %c0_9 = arith.constant 0 : index
    %32 = vector.load %arg8[%c1, %c0_9] : memref<10x16xf32, #tpu.memory_space<vmem>>, vector<1x16xf32>
    tpu.vector_store %arg8[%c1, %c0_9], %31 {strides = array<i32>} : memref<10x16xf32, #tpu.memory_space<vmem>>, vector<1x16xf32>,
    %33 = vector.extract_strided_slice %28 {offsets = [0, 36], sizes = [1, 16], strides = [1, 1]} : vector<1x180xf32> to vector<1x16xf32>
    %c2 = arith.constant 2 : index
    %c0_10 = arith.constant 0 : index
    %34 = vector.load %arg8[%c2, %c0_10] : memref<10x16xf32, #tpu.memory_space<vmem>>, vector<1x16xf32>
    tpu.vector_store %arg8[%c2, %c0_10], %33 {strides = array<i32>} : memref<10x16xf32, #tpu.memory_space<vmem>>, vector<1x16xf32>,
    %35 = vector.extract_strided_slice %28 {offsets = [0, 54], sizes = [1, 16], strides = [1, 1]} : vector<1x180xf32> to vector<1x16xf32>
    %c3 = arith.constant 3 : index
    %c0_11 = arith.constant 0 : index
    %36 = vector.load %arg8[%c3, %c0_11] : memref<10x16xf32, #tpu.memory_space<vmem>>, vector<1x16xf32>
    tpu.vector_store %arg8[%c3, %c0_11], %35 {strides = array<i32>} : memref<10x16xf32, #tpu.memory_space<vmem>>, vector<1x16xf32>,
    %37 = vector.extract_strided_slice %28 {offsets = [0, 72], sizes = [1, 16], strides = [1, 1]} : vector<1x180xf32> to vector<1x16xf32>
    %c4 = arith.constant 4 : index
    %c0_12 = arith.constant 0 : index
    %38 = vector.load %arg8[%c4, %c0_12] : memref<10x16xf32, #tpu.memory_space<vmem>>, vector<1x16xf32>
    tpu.vector_store %arg8[%c4, %c0_12], %37 {strides = array<i32>} : memref<10x16xf32, #tpu.memory_space<vmem>>, vector<1x16xf32>,
    %39 = vector.extract_strided_slice %28 {offsets = [0, 90], sizes = [1, 16], strides = [1, 1]} : vector<1x180xf32> to vector<1x16xf32>
    %c5 = arith.constant 5 : index
    %c0_13 = arith.constant 0 : index
    %40 = vector.load %arg8[%c5, %c0_13] : memref<10x16xf32, #tpu.memory_space<vmem>>, vector<1x16xf32>
    tpu.vector_store %arg8[%c5, %c0_13], %39 {strides = array<i32>} : memref<10x16xf32, #tpu.memory_space<vmem>>, vector<1x16xf32>,
    %41 = vector.extract_strided_slice %28 {offsets = [0, 108], sizes = [1, 16], strides = [1, 1]} : vector<1x180xf32> to vector<1x16xf32>
    %c6 = arith.constant 6 : index
    %c0_14 = arith.constant 0 : index
    %42 = vector.load %arg8[%c6, %c0_14] : memref<10x16xf32, #tpu.memory_space<vmem>>, vector<1x16xf32>
    tpu.vector_store %arg8[%c6, %c0_14], %41 {strides = array<i32>} : memref<10x16xf32, #tpu.memory_space<vmem>>, vector<1x16xf32>,
    %43 = vector.extract_strided_slice %28 {offsets = [0, 126], sizes = [1, 16], strides = [1, 1]} : vector<1x180xf32> to vector<1x16xf32>
    %c7 = arith.constant 7 : index
    %c0_15 = arith.constant 0 : index
    %44 = vector.load %arg8[%c7, %c0_15] : memref<10x16xf32, #tpu.memory_space<vmem>>, vector<1x16xf32>
    tpu.vector_store %arg8[%c7, %c0_15], %43 {strides = array<i32>} : memref<10x16xf32, #tpu.memory_space<vmem>>, vector<1x16xf32>,
    %45 = vector.extract_strided_slice %28 {offsets = [0, 144], sizes = [1, 16], strides = [1, 1]} : vector<1x180xf32> to vector<1x16xf32>
    %c8 = arith.constant 8 : index
    %c0_16 = arith.constant 0 : index
    %46 = vector.load %arg8[%c8, %c0_16] : memref<10x16xf32, #tpu.memory_space<vmem>>, vector<1x16xf32>
    tpu.vector_store %arg8[%c8, %c0_16], %45 {strides = array<i32>} : memref<10x16xf32, #tpu.memory_space<vmem>>, vector<1x16xf32>,
    %47 = vector.extract_strided_slice %28 {offsets = [0, 162], sizes = [1, 16], strides = [1, 1]} : vector<1x180xf32> to vector<1x16xf32>
    %c9 = arith.constant 9 : index
    %c0_17 = arith.constant 0 : index
    %48 = vector.load %arg8[%c9, %c0_17] : memref<10x16xf32, #tpu.memory_space<vmem>>, vector<1x16xf32>
    tpu.vector_store %arg8[%c9, %c0_17], %47 {strides = array<i32>} : memref<10x16xf32, #tpu.memory_space<vmem>>, vector<1x16xf32>,
    %c0_18 = arith.constant 0 : index
    %c0_19 = arith.constant 0 : index
    %c0_20 = arith.constant 0 : index
    %49 = vector.load %arg5[%c0_18, %c0_19, %c0_20] : memref<1x32x10xf32, #tpu.memory_space<vmem>>, vector<1x32x10xf32>
    %50 = vector.shape_cast %49 : vector<1x32x10xf32> to vector<32x10xf32>
    %c0_21 = arith.constant 0 : index
    %c0_22 = arith.constant 0 : index
    %51 = vector.load %arg8[%c0_21, %c0_22] : memref<10x16xf32, #tpu.memory_space<vmem>>, vector<10x16xf32>
    %cst_23 = arith.constant dense<0.000000e+00> : vector<32x16xf32>
    %52 = tpu.matmul %50, %51, %cst_23 {dimension_numbers = #tpu.dot_dimension_numbers<[1], [0], [0], [1], [0, 0, 1, 1], [], []>} : vector<32x10xf32>, vector<10x16xf32>, vector<32x16xf32> -> vector<32x16xf32>
    %c0_24 = arith.constant 0 : index
    %c0_25 = arith.constant 0 : index
    %53 = vector.load %arg6[%c0_24, %c0_25] : memref<16x64xf32, #tpu.memory_space<vmem>>, vector<16x64xf32>
    %cst_26 = arith.constant dense<0.000000e+00> : vector<32x64xf32>
    %54 = tpu.matmul %52, %53, %cst_26 {dimension_numbers = #tpu.dot_dimension_numbers<[1], [0], [0], [1], [0, 0, 1, 1], [], []>} : vector<32x16xf32>, vector<16x64xf32>, vector<32x64xf32> -> vector<32x64xf32>
    %c0_27 = arith.constant 0 : index
    %c0_28 = arith.constant 0 : index
    %c0_29 = arith.constant 0 : index
    %55 = vector.load %arg7[%c0_27, %c0_28, %c0_29] : memref<1x32x64xf32, #tpu.memory_space<vmem>>, vector<1x32x64xf32>
    %56 = vector.shape_cast %55 : vector<1x32x64xf32> to vector<32x64xf32>
    %57 = vector.shape_cast %54 : vector<32x64xf32> to vector<1x32x64xf32>
    tpu.vector_store %arg7[%c0_27, %c0_28, %c0_29], %57 {strides = array<i32>} : memref<1x32x64xf32, #tpu.memory_space<vmem>>, vector<1x32x64xf32>,
    return
  }
  func.func @transform_0(%arg0: i32, %arg1: i32) -> (i32, i32, i32, i32) {
    %c0_i32 = arith.constant 0 : i32
    %c0_i32_0 = arith.constant 0 : i32
    %c0_i32_1 = arith.constant 0 : i32
    return %arg0, %arg1, %c0_i32, %c0_i32_0 : i32, i32, i32, i32
  }
  func.func @transform_1(%arg0: i32, %arg1: i32) -> (i32, i32) {
    %c0_i32 = arith.constant 0 : i32
    %c0_i32_0 = arith.constant 0 : i32
    %c0_i32_1 = arith.constant 0 : i32
    return %c0_i32, %c0_i32_0 : i32, i32
  }
  func.func @transform_2(%arg0: i32, %arg1: i32) -> i32 {
    %c0_i32 = arith.constant 0 : i32
    %c0_i32_0 = arith.constant 0 : i32
    return %c0_i32 : i32
  }
  func.func @transform_3(%arg0: i32, %arg1: i32) -> (i32, i32, i32) {
    %c0_i32 = arith.constant 0 : i32
    %c0_i32_0 = arith.constant 0 : i32
    %c0_i32_1 = arith.constant 0 : i32
    return %arg1, %c0_i32, %c0_i32_0 : i32, i32, i32
  }
  func.func @transform_4(%arg0: i32, %arg1: i32) -> (i32, i32) {
    %c0_i32 = arith.constant 0 : i32
    %c0_i32_0 = arith.constant 0 : i32
    %c0_i32_1 = arith.constant 0 : i32
    return %c0_i32, %c0_i32_0 : i32, i32
  }
  func.func @transform_5(%arg0: i32, %arg1: i32) -> (i32, i32, i32) {
    %c0_i32 = arith.constant 0 : i32
    %c0_i32_0 = arith.constant 0 : i32
    return %arg0, %arg1, %c0_i32 : i32, i32, i32
  }
}

</mosaic_0001>

<llo_original>
// kernel: tpu_custom_call.1
$region0: #{tpu_custom_call.1}
  #allocation0 [shape = 'u32[]', space=smem, size = 0x4, offset = 0x4, fixed_abs, tag = 'smem constant byte address 0x4 - core index']
  #allocation1 [shape = 'u32[144,128]{1,0:T(1,128)}', space=vmem, size = 0x12000, scoped, tag = 'internal scratch']
  #allocation2 [shape = 'f32[10,16]{1,0:T(8,128)}', space=vmem, size = 0x2000, scoped, tag = 'scratch operand']
  #allocation3 [shape = 'f32[1]{0:T(128)S(6)}', space=smem, size = 0x200, scoped, tag = 'scoped memory for tpu_custom_call.1']
  %s0 = inlined_call_operand.hbm [shape: bf16[2,2,128,256], index: 0, kind: input, shape index: {}]
  %s1 = inlined_call_operand.vmem [shape: bf16[9,128], index: 1, kind: input, shape index: {}]
  %s2 = inlined_call_operand.<no memory space> [shape: f32[1], index: 2, kind: input, shape index: {}]
  %s3 = inlined_call_operand.vmem [shape: f32[2,32,10], index: 3, kind: input, shape index: {}]
  %s4 = inlined_call_operand.vmem [shape: f32[16,64], index: 4, kind: input, shape index: {}]
  %s5 = inlined_call_operand.hbm [shape: f32[2,64,64], index: 5, kind: output, shape index: {}]
  %s6 = sld [smem:[#allocation0]]
  $region57: #{tpu_custom_call.1} parent=0
    _
  %s8 = ssub.s32 1, %s6
  %s9 = scalar_select 0, %s8, %s6
  %10 = sst [smem:[#allocation3]] %s2
  $region1: #{tpu_custom_call.1} parent=0
    #allocation4 [shape = 'u8[131072]{0}', space=vmem, size = 0x20000, scoped, tag = 'input window, operand 0']
    #allocation5 [shape = 's32[2]{0}', space=sflag, size = 0x8, scoped, tag = 'scoped memory for tpu_custom_call.1']
    #allocation6 [shape = 's32[2]{0}', space=sflag, size = 0x8, scoped, tag = 'scoped memory for tpu_custom_call.1']
    #allocation7 [shape = 'u8[32768]{0}', space=vmem, size = 0x8000, scoped, tag = 'output window, operand 0']
    %11 = vsyncpa [#allocation5], 0
    %s12 = scalar_lea.sflag [#allocation5], 1
    %13 = vsyncpa %s12, 0
    %14 = vsyncpa [#allocation6], 0
    %s15 = scalar_lea.sflag [#allocation6], 1
    %16 = vsyncpa %s15, 0
    loop: start=0, step=1, limit=6
    $region2: #{tpu_custom_call.1} parent=1 // loop_pre_header
      _
    $region3: #{tpu_custom_call.1} parent=1 // loop_header
      %s18 = sphi 0, %s22
      %p19 = scmp.ge.s32.totalorder %s18, 6
      %s25 = sphi 0, %s37
      %s26 = sphi 0, %s33
      %s27 = sphi 0, %s25
      %s28 = sphi 0, %s26
      %s29 = sphi 0, %s27
      %s30 = sphi 0, %s28
      %s42 = sphi 0, %s44
      %s45 = sphi 0, %s42
      %s46 = sphi 0, %s45
      %s62 = sphi 0, %s46
      %s66 = sphi 0, %s66
      %s68 = sphi 0, %s66
      %s69 = sphi 0, %s68
      %s83 = sphi 0, %s69
      %s87 = sphi 0, %s87
      %s89 = sphi 0, %s87
      %s90 = sphi 0, %s89
      %s104 = sphi 0, %s90
      %s110 = sphi 0, %s112
      %s113 = sphi 0, %s110
      %s114 = sphi 0, %s113
      %s130 = sphi 0, %s114
      %s134 = sphi 0, %s134
      %s136 = sphi 0, %s134
      %s137 = sphi 0, %s136
      %s151 = sphi 0, %s137
      %s159 = sphi 0, %s161
      %s162 = sphi 0, %s159
      %s163 = sphi 0, %s162
      %s179 = sphi 0, %s163
    $region4: #{tpu_custom_call.1} parent=1 // loop_header_branch
      %21 = sbr.rel (%p19) target = $region8
    $region5: #{tpu_custom_call.1} parent=1 // loop_body
      %s23 = ssub.s32 %s18, 1
      %s24 = ssub.s32 %s18, 2
      %s31 = sadd.s32 1, %s26
      %p32 = scmp.ge.s32.totalorder %s31, 2
      %s33 = scalar_select %p32, 0, %s31
      %s34 = sadd.s32 1, %s25
      %s35 = scalar_select %p32, %s34, %s25
      %p36 = scmp.ge.s32.totalorder %s35, 2
      %s37 = scalar_select %p36, 0, %s35
      %s38 = ssub.s32 %s25, %s37
      %s39 = ssub.s32 %s26, %s33
      %s40 = sor.u32 %s38, %s39
      %p41 = scmp.eq.s32.totalorder %s40, 0
      %s43 = sadd.s32 %s42, 1
      %s44 = scalar_select %p41, %s42, %s43
      %p47 = pneg %p41
      %p48 = scmp.eq.s32.totalorder %s18, 3
      %p49 = por %p47, %p48
      %p50 = scmp.ne.s32.totalorder %s42, %s45
      %p51 = scmp.eq.s32.totalorder %s18, 0
      %p52 = por %p50, %p51
      %p53 = scmp.ne.s32.totalorder %s42, %s45
      %p54 = scmp.eq.s32.totalorder %s23, 3
      %p55 = por %p53, %p54
      %p56 = scmp.ne.s32.totalorder %s45, %s46
      %p57 = scmp.eq.s32.totalorder %s23, 0
      %p58 = por %p56, %p57
      %p59 = scmp.ne.s32.totalorder %s45, %s46
      %p60 = scmp.eq.s32.totalorder %s24, 3
      %p61 = por %p59, %p60
      %p63 = scmp.ne.s32.totalorder %s46, %s62
      %p64 = scmp.eq.s32.totalorder %s24, 0
      %p65 = por %p63, %p64
      %s67 = sadd.s32 %s66, 1
      %p70 = scmp.eq.s32.totalorder %s18, 3
      %p71 = scmp.ne.s32.totalorder %s66, %s68
      %p72 = scmp.eq.s32.totalorder %s18, 0
      %p73 = por %p71, %p72
      %p74 = scmp.ne.s32.totalorder %s66, %s68
      %p75 = scmp.eq.s32.totalorder %s23, 3
      %p76 = por %p74, %p75
      %p77 = scmp.ne.s32.totalorder %s68, %s69
      %p78 = scmp.eq.s32.totalorder %s23, 0
      %p79 = por %p77, %p78
      %p80 = scmp.ne.s32.totalorder %s68, %s69
      %p81 = scmp.eq.s32.totalorder %s24, 3
      %p82 = por %p80, %p81
      %p84 = scmp.ne.s32.totalorder %s69, %s83
      %p85 = scmp.eq.s32.totalorder %s24, 0
      %p86 = por %p84, %p85
      %s88 = sadd.s32 %s87, 1
      %p91 = scmp.eq.s32.totalorder %s18, 3
      %p92 = scmp.ne.s32.totalorder %s87, %s89
      %p93 = scmp.eq.s32.totalorder %s18, 0
      %p94 = por %p92, %p93
      %p95 = scmp.ne.s32.totalorder %s87, %s89
      %p96 = scmp.eq.s32.totalorder %s23, 3
      %p97 = por %p95, %p96
      %p98 = scmp.ne.s32.totalorder %s89, %s90
      %p99 = scmp.eq.s32.totalorder %s23, 0
      %p100 = por %p98, %p99
      %p101 = scmp.ne.s32.totalorder %s89, %s90
      %p102 = scmp.eq.s32.totalorder %s24, 3
      %p103 = por %p101, %p102
      %p105 = scmp.ne.s32.totalorder %s90, %s104
      %p106 = scmp.eq.s32.totalorder %s24, 0
      %p107 = por %p105, %p106
      %s108 = ssub.s32 %s26, %s33
      %p109 = scmp.eq.s32.totalorder %s108, 0
      %s111 = sadd.s32 %s110, 1
      %s112 = scalar_select %p109, %s110, %s111
      %p115 = pneg %p109
      %p116 = scmp.eq.s32.totalorder %s18, 3
      %p117 = por %p115, %p116
      %p118 = scmp.ne.s32.totalorder %s110, %s113
      %p119 = scmp.eq.s32.totalorder %s18, 0
      %p120 = por %p118, %p119
      %p121 = scmp.ne.s32.totalorder %s110, %s113
      %p122 = scmp.eq.s32.totalorder %s23, 3
      %p123 = por %p121, %p122
      %p124 = scmp.ne.s32.totalorder %s113, %s114
      %p125 = scmp.eq.s32.totalorder %s23, 0
      %p126 = por %p124, %p125
      %p127 = scmp.ne.s32.totalorder %s113, %s114
      %p128 = scmp.eq.s32.totalorder %s24, 3
      %p129 = por %p127, %p128
      %p131 = scmp.ne.s32.totalorder %s114, %s130
      %p132 = scmp.eq.s32.totalorder %s24, 0
      %p133 = por %p131, %p132
      %s135 = sadd.s32 %s134, 1
      %p138 = scmp.eq.s32.totalorder %s18, 3
      %p139 = scmp.ne.s32.totalorder %s134, %s136
      %p140 = scmp.eq.s32.totalorder %s18, 0
      %p141 = por %p139, %p140
      %p142 = scmp.ne.s32.totalorder %s134, %s136
      %p143 = scmp.eq.s32.totalorder %s23, 3
      %p144 = por %p142, %p143
      %p145 = scmp.ne.s32.totalorder %s136, %s137
      %p146 = scmp.eq.s32.totalorder %s23, 0
      %p147 = por %p145, %p146
      %p148 = scmp.ne.s32.totalorder %s136, %s137
      %p149 = scmp.eq.s32.totalorder %s24, 3
      %p150 = por %p148, %p149
      %p152 = scmp.ne.s32.totalorder %s137, %s151
      %p153 = scmp.eq.s32.totalorder %s24, 0
      %p154 = por %p152, %p153
      %s155 = ssub.s32 %s25, %s37
      %s156 = ssub.s32 %s26, %s33
      %s157 = sor.u32 %s155, %s156
      %p158 = scmp.eq.s32.totalorder %s157, 0
      %s160 = sadd.s32 %s159, 1
      %s161 = scalar_select %p158, %s159, %s160
      %p164 = pneg %p158
      %p165 = scmp.eq.s32.totalorder %s18, 3
      %p166 = por %p164, %p165
      %p167 = scmp.ne.s32.totalorder %s159, %s162
      %p168 = scmp.eq.s32.totalorder %s18, 0
      %p169 = por %p167, %p168
      %p170 = scmp.ne.s32.totalorder %s159, %s162
      %p171 = scmp.eq.s32.totalorder %s23, 3
      %p172 = por %p170, %p171
      %p173 = scmp.ne.s32.totalorder %s162, %s163
      %p174 = scmp.eq.s32.totalorder %s23, 0
      %p175 = por %p173, %p174
      %p176 = scmp.ne.s32.totalorder %s162, %s163
      %p177 = scmp.eq.s32.totalorder %s24, 3
      %p178 = por %p176, %p177
      %p180 = scmp.ne.s32.totalorder %s163, %s179
      %p181 = scmp.eq.s32.totalorder %s24, 0
      %p182 = por %p180, %p181
      %p183 = scmp.le.s32.totalorder 1, %s18
      %p184 = scmp.lt.s32.totalorder %s18, 5
      %p185 = pnand %p183, %p184
      %p186 = pneg %p185
      // Predicated region
      $region9: #{tpu_custom_call.1} parent=5 // pred_check
        _
      $region10: #{tpu_custom_call.1} parent=5 // pred_check_branch
        %188 = sbr.rel (%p185) target = $region12
      $region11: #{tpu_custom_call.1} parent=5 // pred_region
        %s189 = ssub.s32 %s18, 1
        // Predicated region
        $region13: #{tpu_custom_call.1} parent=11 // pred_check
          %p190 = pneg %p79
        $region14: #{tpu_custom_call.1} parent=11 // pred_check_branch
          %192 = sbr.rel (%p190) target = $region16
        $region15: #{tpu_custom_call.1} parent=11 // pred_region
          _
        $region16: #{tpu_custom_call.1} parent=11 // pred_fallthru
          _
        // Predicated region
        $region17: #{tpu_custom_call.1} parent=11 // pred_check
          %p193 = pneg %p100
        $region18: #{tpu_custom_call.1} parent=11 // pred_check_branch
          %195 = sbr.rel (%p193) target = $region20
        $region19: #{tpu_custom_call.1} parent=11 // pred_region
          _
        $region20: #{tpu_custom_call.1} parent=11 // pred_fallthru
          _
        // Predicated region
        $region21: #{tpu_custom_call.1} parent=11 // pred_check
          %p196 = pneg %p147
        $region22: #{tpu_custom_call.1} parent=11 // pred_check_branch
          %198 = sbr.rel (%p196) target = $region24
        $region23: #{tpu_custom_call.1} parent=11 // pred_region
          _
        $region24: #{tpu_custom_call.1} parent=11 // pred_fallthru
          _
      $region12: #{tpu_custom_call.1} parent=5 // pred_fallthru
        _
      %p199 = scmp.lt.s32.totalorder %s18, 4
      // Predicated region
      $region25: #{tpu_custom_call.1} parent=5 // pred_check
        %p200 = pneg %p199
      $region26: #{tpu_custom_call.1} parent=5 // pred_check_branch
        %202 = sbr.rel (%p200) target = $region28
      $region27: #{tpu_custom_call.1} parent=5 // pred_region
        // Predicated region
        $region29: #{tpu_custom_call.1} parent=27 // pred_check
          %p203 = pneg %p52
        $region30: #{tpu_custom_call.1} parent=27 // pred_check_branch
          %205 = sbr.rel (%p203) target = $region32
        $region31: #{tpu_custom_call.1} parent=27 // pred_region
          %s206 = sand.u32 %s42, 1
          %s207 = scalar_lea.sflag [#allocation5], %s206
          %s208 = sand.u32 %s42, 1
          %s209 = smul.addr %s208, 128
          %s210 = scalar_lea.vmem [#allocation4], %s209
          %s212 = ssub.s32 2048, 2048
          %213 = vsyncadd %s207, %s212
          %s214 = smul.addr %s26, 32
          %s215 = smul.addr %s25, 64
          %s216 = sadd.s32 %s214, %s215
          %s217 = smul.addr %s216, 64
          %s218 = scalar_lea.hbm %s0, %s217
          %s219 = sshll.u32 %s210, 4
          %s220 = int_to_ptr.vmem [resolvable:$true] %s219
          %225 = dma.hbm_to_vmem [thread:$0]  %s218, 2048, %s220, %s207, 128, 128, 8
        $region32: #{tpu_custom_call.1} parent=27 // pred_fallthru
          _
        // Predicated region
        $region33: #{tpu_custom_call.1} parent=27 // pred_check
          %p226 = pneg %p120
        $region34: #{tpu_custom_call.1} parent=27 // pred_check_branch
          %228 = sbr.rel (%p226) target = $region36
        $region35: #{tpu_custom_call.1} parent=27 // pred_region
          %p229 = scmp.lt.s32.totalorder %s26, 1
          %s230 = scalar_select %p229, %s26, 1
          %s231 = smul.addr %s230, 4
          %s232 = smul.addr %s231, 8
          %s233 = scalar_lea.vmem %s3, %s232
        $region36: #{tpu_custom_call.1} parent=27 // pred_fallthru
          _
      $region28: #{tpu_custom_call.1} parent=5 // pred_fallthru
        _
      %p234 = scmp.le.s32.totalorder 1, %s18
      %p235 = scmp.lt.s32.totalorder %s18, 5
      %p236 = pnand %p234, %p235
      %p237 = pneg %p236
      // Predicated region
      $region37: #{tpu_custom_call.1} parent=5 // pred_check
        _
      $region38: #{tpu_custom_call.1} parent=5 // pred_check_branch
        %239 = sbr.rel (%p236) target = $region40
      $region39: #{tpu_custom_call.1} parent=5 // pred_region
        %s240 = ssub.s32 %s18, 1
        %s241 = sand.u32 %s45, 1
        %s242 = scalar_lea.sflag [#allocation5], %s241
        %s243 = sand.u32 %s45, 1
        %s244 = smul.addr %s243, 128
        %s245 = scalar_lea.vmem [#allocation4], %s244
        // Predicated region
        $region41: #{tpu_custom_call.1} parent=39 // pred_check
          %p246 = pneg %p58
        $region42: #{tpu_custom_call.1} parent=39 // pred_check_branch
          %248 = sbr.rel (%p246) target = $region44
        $region43: #{tpu_custom_call.1} parent=39 // pred_region
          %249 = dma.done %s242, 2048
        $region44: #{tpu_custom_call.1} parent=39 // pred_fallthru
          _
        %s250 = sand.u32 %s45, 1
        %s251 = scalar_lea.sflag [#allocation5], %s250
        %s252 = sand.u32 %s45, 1
        %s253 = smul.addr %s252, 128
        %s254 = scalar_lea.vmem [#allocation4], %s253
        %p255 = pneg %p58
        %p256 = pneg %p55
        %p257 = pneg %p79
        %p258 = pneg %p76
        %p259 = pneg %p100
        %p260 = pneg %p97
        %p261 = scmp.lt.s32.totalorder %s28, 1
        %s262 = scalar_select %p261, %s28, 1
        %s263 = smul.addr %s262, 4
        %s264 = smul.addr %s263, 8
        %s265 = scalar_lea.vmem %s3, %s264
        %p266 = pneg %p126
        %p267 = pneg %p123
        %p268 = pneg %p147
        %p269 = pneg %p144
        %p270 = pneg %p175
        %p271 = pneg %p172
        %s272 = sand.u32 %s162, 1
        %s273 = scalar_lea.sflag [#allocation6], %s272
        %s274 = sand.u32 %s162, 1
        %s275 = smul.addr %s274, 32
        %s276 = scalar_lea.vmem [#allocation7], %s275
        %p277 = scmp.lt.s32.totalorder %s28, 1
        %s278 = scalar_select %p277, %s28, 1
        %s279 = smul.addr %s278, 4
        %s280 = smul.addr %s279, 8
        %s281 = scalar_lea.vmem %s3, %s280
        %s282 = smul.u32 4, %s28
        %v284 = vld [vmem:[%s1] sm:$0xf]
        %v285 = vld [vmem:[%s1 + $0x4] sm:$0x1]
        %v286 = vld [vmem:[%s245] sm:$0xff]
        %v287 = vld [vmem:[%s245 + $0x8] sm:$0xff]
        %v288 = vld [vmem:[%s245 + $0x10] sm:$0xff]
        %v289 = vld [vmem:[%s245 + $0x18] sm:$0xff]
        %v290 = vld [vmem:[%s245 + $0x20] sm:$0xff]
        %v291 = vld [vmem:[%s245 + $0x28] sm:$0xff]
        %v292 = vld [vmem:[%s245 + $0x30] sm:$0xff]
        %v293 = vld [vmem:[%s245 + $0x38] sm:$0xff]
        %v294 = vld [vmem:[%s245 + $0x40] sm:$0xff]
        %v295 = vld [vmem:[%s245 + $0x48] sm:$0xff]
        %v296 = vld [vmem:[%s245 + $0x50] sm:$0xff]
        %v297 = vld [vmem:[%s245 + $0x58] sm:$0xff]
        %v298 = vld [vmem:[%s245 + $0x60] sm:$0xff]
        %v299 = vld [vmem:[%s245 + $0x68] sm:$0xff]
        %v300 = vld [vmem:[%s245 + $0x70] sm:$0xff]
        %v301 = vld [vmem:[%s245 + $0x78] sm:$0xff]
        %v304 = vunpack.c.l.b16 %v284
        %v305 = vunpack.c.l.b16 %v285
        %v306 = vpack.c.b16 %v305, %v304
        %v324 = vunpack.c.l.b16 %v286
        %v325 = vunpack.c.h.b16 %v286
        %v326 = vunpack.c.l.b16 %v287
        %v327 = vunpack.c.h.b16 %v287
        %v328 = vunpack.c.l.b16 %v288
        %v329 = vunpack.c.h.b16 %v288
        %v330 = vunpack.c.l.b16 %v289
        %v331 = vunpack.c.h.b16 %v289
        %v332 = vunpack.c.l.b16 %v290
        %v333 = vunpack.c.h.b16 %v290
        %v334 = vunpack.c.l.b16 %v291
        %v335 = vunpack.c.h.b16 %v291
        %v336 = vunpack.c.l.b16 %v292
        %v337 = vunpack.c.h.b16 %v292
        %v338 = vunpack.c.l.b16 %v293
        %v339 = vunpack.c.h.b16 %v293
        %v340 = vunpack.c.l.b16 %v294
        %v341 = vunpack.c.h.b16 %v294
        %v342 = vunpack.c.l.b16 %v295
        %v343 = vunpack.c.h.b16 %v295
        %v344 = vunpack.c.l.b16 %v296
        %v345 = vunpack.c.h.b16 %v296
        %v346 = vunpack.c.l.b16 %v297
        %v347 = vunpack.c.h.b16 %v297
        %v348 = vunpack.c.l.b16 %v298
        %v349 = vunpack.c.h.b16 %v298
        %v350 = vunpack.c.l.b16 %v299
        %v351 = vunpack.c.h.b16 %v299
        %v352 = vunpack.c.l.b16 %v300
        %v353 = vunpack.c.h.b16 %v300
        %v354 = vunpack.c.l.b16 %v301
        %v355 = vunpack.c.h.b16 %v301
        %v356 = vpack.c.b16 %v326, %v324
        %v357 = vpack.c.b16 %v327, %v325
        %v358 = vpack.c.b16 %v330, %v328
        %v359 = vpack.c.b16 %v331, %v329
        %v360 = vpack.c.b16 %v334, %v332
        %v361 = vpack.c.b16 %v335, %v333
        %v362 = vpack.c.b16 %v338, %v336
        %v363 = vpack.c.b16 %v339, %v337
        %v364 = vpack.c.b16 %v342, %v340
        %v365 = vpack.c.b16 %v343, %v341
        %v366 = vpack.c.b16 %v346, %v344
        %v367 = vpack.c.b16 %v347, %v345
        %v368 = vpack.c.b16 %v350, %v348
        %v369 = vpack.c.b16 %v351, %v349
        %v370 = vpack.c.b16 %v354, %v352
        %v371 = vpack.c.b16 %v355, %v353
        %388 = vmatprep.subr.bf16.mxu0 %v357
        %389 = vmatpush1.bf16.msra.mxu0 %v356
        %390 = vmatprep.subr.bf16.mxu0 %v359
        %391 = vmatpush1.bf16.msra.mxu0 %v358
        %392 = vmatprep.subr.bf16.mxu0 %v361
        %393 = vmatpush1.bf16.msra.mxu0 %v360
        %394 = vmatprep.subr.bf16.mxu0 %v363
        %395 = vmatpush1.bf16.msra.mxu0 %v362
        %396 = vmatprep.subr.bf16.mxu0 %v365
        %397 = vmatpush1.bf16.msra.mxu0 %v364
        %398 = vmatprep.subr.bf16.mxu0 %v367
        %399 = vmatpush1.bf16.msra.mxu0 %v366
        %400 = vmatprep.subr.bf16.mxu0 %v369
        %401 = vmatpush1.bf16.msra.mxu0 %v368
        %402 = vmatprep.subr.bf16.mxu0 %v371
        %403 = vmatpush1.bf16.msra.mxu0 %v370
        %404 = vmatprep.subr.bf16.mxu0 0
        %405 = vmatpush1.bf16.msra.mxu0 0
        %406 = vmatprep.subr.bf16.mxu0 0
        %407 = vmatpush1.bf16.msra.mxu0 0
        %408 = vmatprep.subr.bf16.mxu0 0
        %409 = vmatpush1.bf16.msra.mxu0 0
        %410 = vmatprep.subr.bf16.mxu0 0
        %411 = vmatpush1.bf16.msra.mxu0 0
        %412 = vmatprep.subr.bf16.mxu0 0
        %413 = vmatpush1.bf16.msra.mxu0 0
        %414 = vmatprep.subr.bf16.mxu0 0
        %415 = vmatpush1.bf16.msra.mxu0 0
        %416 = vmatprep.subr.bf16.mxu0 0
        %417 = vmatpush1.bf16.msra.mxu0 0
        %418 = vmatprep.subr.bf16.mxu0 0
        %419 = vmatpush1.bf16.msra.mxu0 0
        %420 = vmatprep.mubr.bf16.mxu0 0
        %421 = vmatmul.mubr.bf16.gmra.mrb[0].mxu0 %v306
        %v422 = vpop.f32.mrb[0].mxu0
        %v423 = vadd.f32 0.0, %v422
        %v424 = vpop.f32.mrb[0].mxu0
        %v425 = vadd.f32 0.0, %v424
        %v426 = vpop.f32.mrb[0].mxu0
        %v427 = vadd.f32 0.0, %v426
        %v428 = vpop.f32.mrb[0].mxu0
        %v429 = vadd.f32 0.0, %v428
        %430 = vdwg.mxu0
        %v433 = vrot.slane %v423, 1
        %v434 = vrot.slane %v425, 1
        %435 = vrot.lane.b32.xlu0 %v433, 127
        %v436 = vpop.permute.xlu0 %435
        %437 = vrot.lane.b32.xlu0 %v434, 127
        %v438 = vpop.permute.xlu0 %437
        %vm439 = vcmask 1039360
        %v440 = vsel %vm439, %v436, %v438
        %v443 = vadd.f32 %v423, %v440
        %v444 = vadd.f32 %v425, %v438
        %v445 = vrot.slane %v423, 2
        %v446 = vrot.slane %v425, 2
        %447 = vrot.lane.b32.xlu0 %v445, 126
        %v448 = vpop.permute.xlu0 %447
        %449 = vrot.lane.b32.xlu0 %v446, 126
        %v450 = vpop.permute.xlu0 %449
        %vm451 = vcmask 1031168
        %v452 = vsel %vm451, %v448, %v450
        %v455 = vadd.f32 %v443, %v452
        %v456 = vadd.f32 %v444, %v450
        %v457 = vrot.slane %v423, 3
        %v458 = vrot.slane %v425, 3
        %459 = vrot.lane.b32.xlu0 %v457, 110
        %v460 = vpop.permute.xlu0 %459
        %461 = vrot.lane.b32.xlu0 %v458, 110
        %v462 = vpop.permute.xlu0 %461
        %vm463 = vcmask 900096
        %v464 = vsel %vm463, %v460, %v462
        %v467 = vadd.f32 %v455, %v464
        %v468 = vadd.f32 %v456, %v462
        %v469 = vrot.slane %v423, 4
        %v470 = vrot.slane %v425, 4
        %471 = vrot.lane.b32.xlu0 %v469, 109
        %v472 = vpop.permute.xlu0 %471
        %473 = vrot.lane.b32.xlu0 %v470, 109
        %v474 = vpop.permute.xlu0 %473
        %vm475 = vcmask 891904
        %v476 = vsel %vm475, %v472, %v474
        %v479 = vadd.f32 %v467, %v476
        %v480 = vadd.f32 %v468, %v474
        %v481 = vrot.slane %v423, 5
        %v482 = vrot.slane %v425, 5
        %483 = vrot.lane.b32.xlu0 %v481, 108
        %v484 = vpop.permute.xlu0 %483
        %485 = vrot.lane.b32.xlu0 %v482, 108
        %v486 = vpop.permute.xlu0 %485
        %vm487 = vcmask 883712
        %v488 = vsel %vm487, %v484, %v486
        %v491 = vadd.f32 %v479, %v488
        %v492 = vadd.f32 %v480, %v486
        %v493 = vrot.slane %v423, 6
        %v494 = vrot.slane %v425, 6
        %495 = vrot.lane.b32.xlu0 %v493, 92
        %v496 = vpop.permute.xlu0 %495
        %497 = vrot.lane.b32.xlu0 %v494, 92
        %v498 = vpop.permute.xlu0 %497
        %vm499 = vcmask 752640
        %v500 = vsel %vm499, %v496, %v498
        %v503 = vadd.f32 %v491, %v500
        %v504 = vadd.f32 %v492, %v498
        %v505 = vrot.slane %v423, 7
        %v506 = vrot.slane %v425, 7
        %507 = vrot.lane.b32.xlu0 %v505, 91
        %v508 = vpop.permute.xlu0 %507
        %509 = vrot.lane.b32.xlu0 %v506, 91
        %v510 = vpop.permute.xlu0 %509
        %vm511 = vcmask 744448
        %v512 = vsel %vm511, %v508, %v510
        %v515 = vadd.f32 %v503, %v512
        %v516 = vadd.f32 %v504, %v510
        %519 = vrot.lane.b32.xlu0 %v427, 90
        %v520 = vpop.permute.xlu0 %519
        %521 = vrot.lane.b32.xlu0 %v429, 90
        %v522 = vpop.permute.xlu0 %521
        %vm523 = vcmask 736256
        %v524 = vsel %vm523, %v520, %v522
        %v527 = vadd.f32 %v515, %v524
        %v528 = vadd.f32 %v516, %v522
        %s529 = sld [smem:[#allocation3]]
        %v530 = vstv %s529
        %v531 = vadd.f32 %v527, %v530
        %v532 = vadd.f32 %v528, %v530
        %v533 = vxor.u32 %v531, 2147483648
        %v534 = vxor.u32 %v532, 2147483648
        %v535 = vmul.f32 %v533, 1.442695
        %v536 = vpow.pop %v535
        %v537 = vmul.f32 %v534, 1.442695
        %v538 = vpow.pop %v537
        %v539 = vadd.f32 %v536, 1.0
        %v540 = vadd.f32 %v538, 1.0
        %v541 = vrcp.pop %v539
        %v542 = vmul.f32 1.0, %v541
        %v543 = vrcp.pop %v540
        %v544 = vmul.f32 1.0, %v543
        %vm545 = vcmask 122880
        %546 = vst.msk [vmem:[#allocation2] sm:$0x1] %vm545, %v542
        %548 = vrot.lane.b32.xlu0 %v542, 110
        %v549 = vpop.permute.xlu0 %548
        %551 = vst.msk [vmem:[#allocation2 + $0x1] sm:$0x1] %vm545, %v549
        %552 = vrot.lane.b32.xlu0 %v542, 92
        %v553 = vpop.permute.xlu0 %552
        %555 = vst.msk [vmem:[#allocation2 + $0x2] sm:$0x1] %vm545, %v553
        %556 = vrot.lane.b32.xlu0 %v542, 74
        %v557 = vpop.permute.xlu0 %556
        %559 = vst.msk [vmem:[#allocation2 + $0x3] sm:$0x1] %vm545, %v557
        %560 = vrot.lane.b32.xlu0 %v542, 56
        %v561 = vpop.permute.xlu0 %560
        %563 = vst.msk [vmem:[#allocation2 + $0x4] sm:$0x1] %vm545, %v561
        %564 = vrot.lane.b32.xlu0 %v542, 38
        %v565 = vpop.permute.xlu0 %564
        %567 = vst.msk [vmem:[#allocation2 + $0x5] sm:$0x1] %vm545, %v565
        %568 = vrot.lane.b32.xlu0 %v542, 20
        %v569 = vpop.permute.xlu0 %568
        %571 = vst.msk [vmem:[#allocation2 + $0x6] sm:$0x1] %vm545, %v569
        %573 = vrot.lane.b32.xlu0 %v542, 2
        %v574 = vpop.permute.xlu0 %573
        %575 = vrot.lane.b32.xlu0 %v544, 2
        %v576 = vpop.permute.xlu0 %575
        %vm577 = vcmask 15360
        %v578 = vsel %vm577, %v574, %v576
        %580 = vst.msk [vmem:[#allocation2 + $0x7] sm:$0x1] %vm545, %v578
        %581 = vrot.lane.b32.xlu0 %v544, 112
        %v582 = vpop.permute.xlu0 %581
        %584 = vst.msk [vmem:[#allocation2 + $0x8] sm:$0x1] %vm545, %v582
        %585 = vrot.lane.b32.xlu0 %v544, 94
        %v586 = vpop.permute.xlu0 %585
        %588 = vst.msk [vmem:[#allocation2 + $0x9] sm:$0x1] %vm545, %v586
        %v589 = vld [vmem:[%s281] sm:$0xff]
        %v590 = vld [vmem:[%s281 + $0x8] sm:$0xff]
        %v591 = vld [vmem:[%s281 + $0x10] sm:$0xff]
        %v592 = vld [vmem:[%s281 + $0x18] sm:$0xff]
        %v593 = vld [vmem:[#allocation2] sm:$0xff]
        %v594 = vld [vmem:[#allocation2 + $0x8] sm:$0x3]
        %vm595 = vcmask 80896
        %v597 = vsel %vm595, %v589, 0
        %v600 = vsel %vm595, %v590, 0
        %v603 = vsel %vm595, %v591, 0
        %v606 = vsel %vm595, %v592, 0
        %vm608 = vcmask 1041408
        %v610 = vsel %vm608, %v594, 0
        %612 = vmatprep.subr.mxu0 0.0
        %613 = vmatpush1.msra.mxu0 %v593
        %614 = vmatprep.subr.mxu0 0.0
        %615 = vmatpush1.msra.mxu0 %v610
        %616 = vmatprep.subr.mxu0 0.0
        %617 = vmatpush1.msra.mxu0 0.0
        %618 = vmatprep.subr.mxu0 0.0
        %619 = vmatpush1.msra.mxu0 0.0
        %620 = vmatprep.subr.mxu0 0.0
        %621 = vmatpush1.msra.mxu0 0.0
        %622 = vmatprep.subr.mxu0 0.0
        %623 = vmatpush1.msra.mxu0 0.0
        %624 = vmatprep.subr.mxu0 0.0
        %625 = vmatpush1.msra.mxu0 0.0
        %626 = vmatprep.subr.mxu0 0.0
        %627 = vmatpush1.msra.mxu0 0.0
        %628 = vmatprep.subr.mxu0 0.0
        %629 = vmatpush1.msra.mxu0 0.0
        %630 = vmatprep.subr.mxu0 0.0
        %631 = vmatpush1.msra.mxu0 0.0
        %632 = vmatprep.subr.mxu0 0.0
        %633 = vmatpush1.msra.mxu0 0.0
        %634 = vmatprep.subr.mxu0 0.0
        %635 = vmatpush1.msra.mxu0 0.0
        %636 = vmatprep.subr.mxu0 0.0
        %637 = vmatpush1.msra.mxu0 0.0
        %638 = vmatprep.subr.mxu0 0.0
        %639 = vmatpush1.msra.mxu0 0.0
        %640 = vmatprep.subr.mxu0 0.0
        %641 = vmatpush1.msra.mxu0 0.0
        %642 = vmatprep.subr.mxu0 0.0
        %643 = vmatpush1.msra.mxu0 0.0
        %644 = vmatprep.subr.mxu0 0.0
        %645 = vmatpush1.msra.mxu0 0.0
        %646 = vmatprep.subr.mxu0 0.0
        %647 = vmatpush1.msra.mxu0 0.0
        %648 = vmatprep.subr.mxu0 0.0
        %649 = vmatpush1.msra.mxu0 0.0
        %650 = vmatprep.subr.mxu0 0.0
        %651 = vmatpush1.msra.mxu0 0.0
        %652 = vmatprep.subr.mxu0 0.0
        %653 = vmatpush1.msra.mxu0 0.0
        %654 = vmatprep.subr.mxu0 0.0
        %655 = vmatpush1.msra.mxu0 0.0
        %656 = vmatprep.subr.mxu0 0.0
        %657 = vmatpush1.msra.mxu0 0.0
        %658 = vmatprep.subr.mxu0 0.0
        %659 = vmatpush1.msra.mxu0 0.0
        %660 = vmatprep.subr.mxu0 0.0
        %661 = vmatpush1.msra.mxu0 0.0
        %662 = vmatprep.subr.mxu0 0.0
        %663 = vmatpush1.msra.mxu0 0.0
        %664 = vmatprep.subr.mxu0 0.0
        %665 = vmatpush1.msra.mxu0 0.0
        %666 = vmatprep.subr.mxu0 0.0
        %667 = vmatpush1.msra.mxu0 0.0
        %668 = vmatprep.subr.mxu0 0.0
        %669 = vmatpush1.msra.mxu0 0.0
        %670 = vmatprep.subr.mxu0 0.0
        %671 = vmatpush1.msra.mxu0 0.0
        %672 = vmatprep.subr.mxu0 0.0
        %673 = vmatpush1.msra.mxu0 0.0
        %674 = vmatprep.subr.mxu0 0.0
        %675 = vmatpush1.msra.mxu0 0.0
        %676 = vmatprep.mubr.f32.mxu0 0.0
        %677 = vmatmul.mubr.f32.gmra.mrb[0].mxu0 %v597
        %v678 = vpop.f32.mrb[0].mxu0
        %v679 = vadd.f32 0.0, %v678
        %v680 = vpop.f32.mrb[0].mxu0
        %681 = vmatprep.mubr.f32.mxu0 0.0
        %682 = vmatmul.mubr.f32.gmra.mrb[0].mxu0 %v600
        %v683 = vpop.f32.mrb[0].mxu0
        %v684 = vadd.f32 0.0, %v683
        %v685 = vpop.f32.mrb[0].mxu0
        %686 = vmatprep.mubr.f32.mxu0 0.0
        %687 = vmatmul.mubr.f32.gmra.mrb[0].mxu0 %v603
        %v688 = vpop.f32.mrb[0].mxu0
        %v689 = vadd.f32 0.0, %v688
        %v690 = vpop.f32.mrb[0].mxu0
        %691 = vmatprep.mubr.f32.mxu0 0.0
        %692 = vmatmul.mubr.f32.gmra.mrb[0].mxu0 %v606
        %v693 = vpop.f32.mrb[0].mxu0
        %v694 = vadd.f32 0.0, %v693
        %v695 = vpop.f32.mrb[0].mxu0
        %696 = vdwg.mxu0
        %v697 = vld [vmem:[%s4] sm:$0xff]
        %v698 = vld [vmem:[%s4 + $0x8] sm:$0xff]
        %vm699 = vcmask 130048
        %v701 = vsel %vm699, %v679, 0
        %v704 = vsel %vm699, %v684, 0
        %v707 = vsel %vm699, %v689, 0
        %v710 = vsel %vm699, %v694, 0
        %712 = vmatprep.subr.mxu0 0.0
        %713 = vmatpush1.msra.mxu0 %v697
        %714 = vmatprep.subr.mxu0 0.0
        %715 = vmatpush1.msra.mxu0 %v698
        %716 = vmatprep.subr.mxu0 0.0
        %717 = vmatpush1.msra.mxu0 0.0
        %718 = vmatprep.subr.mxu0 0.0
        %719 = vmatpush1.msra.mxu0 0.0
        %720 = vmatprep.subr.mxu0 0.0
        %721 = vmatpush1.msra.mxu0 0.0
        %722 = vmatprep.subr.mxu0 0.0
        %723 = vmatpush1.msra.mxu0 0.0
        %724 = vmatprep.subr.mxu0 0.0
        %725 = vmatpush1.msra.mxu0 0.0
        %726 = vmatprep.subr.mxu0 0.0
        %727 = vmatpush1.msra.mxu0 0.0
        %728 = vmatprep.subr.mxu0 0.0
        %729 = vmatpush1.msra.mxu0 0.0
        %730 = vmatprep.subr.mxu0 0.0
        %731 = vmatpush1.msra.mxu0 0.0
        %732 = vmatprep.subr.mxu0 0.0
        %733 = vmatpush1.msra.mxu0 0.0
        %734 = vmatprep.subr.mxu0 0.0
        %735 = vmatpush1.msra.mxu0 0.0
        %736 = vmatprep.subr.mxu0 0.0
        %737 = vmatpush1.msra.mxu0 0.0
        %738 = vmatprep.subr.mxu0 0.0
        %739 = vmatpush1.msra.mxu0 0.0
        %740 = vmatprep.subr.mxu0 0.0
        %741 = vmatpush1.msra.mxu0 0.0
        %742 = vmatprep.subr.mxu0 0.0
        %743 = vmatpush1.msra.mxu0 0.0
        %744 = vmatprep.subr.mxu0 0.0
        %745 = vmatpush1.msra.mxu0 0.0
        %746 = vmatprep.subr.mxu0 0.0
        %747 = vmatpush1.msra.mxu0 0.0
        %748 = vmatprep.subr.mxu0 0.0
        %749 = vmatpush1.msra.mxu0 0.0
        %750 = vmatprep.subr.mxu0 0.0
        %751 = vmatpush1.msra.mxu0 0.0
        %752 = vmatprep.subr.mxu0 0.0
        %753 = vmatpush1.msra.mxu0 0.0
        %754 = vmatprep.subr.mxu0 0.0
        %755 = vmatpush1.msra.mxu0 0.0
        %756 = vmatprep.subr.mxu0 0.0
        %757 = vmatpush1.msra.mxu0 0.0
        %758 = vmatprep.subr.mxu0 0.0
        %759 = vmatpush1.msra.mxu0 0.0
        %760 = vmatprep.subr.mxu0 0.0
        %761 = vmatpush1.msra.mxu0 0.0
        %762 = vmatprep.subr.mxu0 0.0
        %763 = vmatpush1.msra.mxu0 0.0
        %764 = vmatprep.subr.mxu0 0.0
        %765 = vmatpush1.msra.mxu0 0.0
        %766 = vmatprep.subr.mxu0 0.0
        %767 = vmatpush1.msra.mxu0 0.0
        %768 = vmatprep.subr.mxu0 0.0
        %769 = vmatpush1.msra.mxu0 0.0
        %770 = vmatprep.subr.mxu0 0.0
        %771 = vmatpush1.msra.mxu0 0.0
        %772 = vmatprep.subr.mxu0 0.0
        %773 = vmatpush1.msra.mxu0 0.0
        %774 = vmatprep.subr.mxu0 0.0
        %775 = vmatpush1.msra.mxu0 0.0
        %776 = vmatprep.mubr.f32.mxu0 0.0
        %777 = vmatmul.mubr.f32.gmra.mrb[0].mxu0 %v701
        %v778 = vpop.f32.mrb[0].mxu0
        %v779 = vadd.f32 0.0, %v778
        %v780 = vpop.f32.mrb[0].mxu0
        %781 = vmatprep.mubr.f32.mxu0 0.0
        %782 = vmatmul.mubr.f32.gmra.mrb[0].mxu0 %v704
        %v783 = vpop.f32.mrb[0].mxu0
        %v784 = vadd.f32 0.0, %v783
        %v785 = vpop.f32.mrb[0].mxu0
        %786 = vmatprep.mubr.f32.mxu0 0.0
        %787 = vmatmul.mubr.f32.gmra.mrb[0].mxu0 %v707
        %v788 = vpop.f32.mrb[0].mxu0
        %v789 = vadd.f32 0.0, %v788
        %v790 = vpop.f32.mrb[0].mxu0
        %791 = vmatprep.mubr.f32.mxu0 0.0
        %792 = vmatmul.mubr.f32.gmra.mrb[0].mxu0 %v710
        %v793 = vpop.f32.mrb[0].mxu0
        %v794 = vadd.f32 0.0, %v793
        %v795 = vpop.f32.mrb[0].mxu0
        %796 = vdwg.mxu0
        %vm797 = vcmask 523264
        %798 = vst.msk [vmem:[%s276] sm:$0xff] %vm797, %v779
        %799 = vst.msk [vmem:[%s276 + $0x8] sm:$0xff] %vm797, %v784
        %800 = vst.msk [vmem:[%s276 + $0x10] sm:$0xff] %vm797, %v789
        %801 = vst.msk [vmem:[%s276 + $0x18] sm:$0xff] %vm797, %v794
        %s802 = sand.u32 %s162, 1
        %s803 = scalar_lea.sflag [#allocation6], %s802
        %s804 = sand.u32 %s162, 1
        %s805 = smul.addr %s804, 32
        %s806 = scalar_lea.vmem [#allocation7], %s805
        // Predicated region
        $region45: #{tpu_custom_call.1} parent=39 // pred_check
          %p807 = pneg %p172
        $region46: #{tpu_custom_call.1} parent=39 // pred_check_branch
          %809 = sbr.rel (%p807) target = $region48
        $region47: #{tpu_custom_call.1} parent=39 // pred_region
          %s810 = smul.u32 4, %s28
          %s812 = ssub.s32 512, 512
          %813 = vsyncadd %s803, %s812
          %s814 = smul.addr %s27, 8
          %s815 = sadd.s32 %s810, %s814
          %s816 = smul.addr %s815, 128
          %s817 = scalar_lea.hbm %s5, %s816
          %s818 = sshll.u32 %s806, 4
          %s819 = int_to_ptr.vmem [resolvable:$true] %s818
          %824 = dma.vmem_to_hbm [thread:$0]  %s819, 512, %s817, %s803, 128, 128, 8
        $region48: #{tpu_custom_call.1} parent=39 // pred_fallthru
          _
      $region40: #{tpu_custom_call.1} parent=5 // pred_fallthru
        _
      %p825 = scmp.le.s32.totalorder 2, %s18
      // Predicated region
      $region49: #{tpu_custom_call.1} parent=5 // pred_check
        %p826 = pneg %p825
      $region50: #{tpu_custom_call.1} parent=5 // pred_check_branch
        %828 = sbr.rel (%p826) target = $region52
      $region51: #{tpu_custom_call.1} parent=5 // pred_region
        %s829 = ssub.s32 %s18, 2
        // Predicated region
        $region53: #{tpu_custom_call.1} parent=51 // pred_check
          %p830 = pneg %p178
        $region54: #{tpu_custom_call.1} parent=51 // pred_check_branch
          %832 = sbr.rel (%p830) target = $region56
        $region55: #{tpu_custom_call.1} parent=51 // pred_region
          %s833 = sand.u32 %s163, 1
          %s834 = scalar_lea.sflag [#allocation6], %s833
          %s835 = sand.u32 %s163, 1
          %s836 = smul.addr %s835, 32
          %s837 = scalar_lea.vmem [#allocation7], %s836
          %838 = dma.done %s834, 512
        $region56: #{tpu_custom_call.1} parent=51 // pred_fallthru
          _
      $region52: #{tpu_custom_call.1} parent=5 // pred_fallthru
        _
    $region6: #{tpu_custom_call.1} parent=1 // loop_footer
      %s22 = sadd.s32 1, %s18
    $region7: #{tpu_custom_call.1} parent=1 // loop_footer_branch
      %17 = sbr.rel target = $region3
    $region8: #{tpu_custom_call.1} parent=1 // loop_exit
      _
    %839 = vsyncpa [#allocation5], 1
    %s840 = scalar_lea.sflag [#allocation5], 1
    %841 = vsyncpa %s840, 1
    %842 = vsyncpa [#allocation6], 1
    %s843 = scalar_lea.sflag [#allocation6], 1
    %844 = vsyncpa %s843, 1

</llo_original>
